<compile_context>
chip_gen: v6e
topology: v6e:2x2x1
jax: 0.10.0
libtpu: 0.0.40
codegen_flags: <defaults>
</compile_context>

<pallas_src>
import numpy as np
import jax
import jax.numpy as jnp
from jax.experimental import pallas as pl
from jax.experimental.pallas import tpu as pltpu


# ------------------- host-side exact layer folding (float64) -------------------

_LAYERS = (               # (param name, kind, kernel, stride)
    ("dimr1", "conv",   1, 2),
    ("dimr2", "conv",   2, 2),
    ("dimr3", "conv",   1, 2),
    ("up1",   "deconv", 1, 2),
    ("up2",   "deconv", 2, 2),
    ("up3",   "deconv", 5, 2),
    ("conv",  "conv",   1, 1),
)


def _conv_taps(Hi, Wi, k, s):
    """0/1 gather matrices for Conv2d(kernel=k, stride=s, padding=0), per element."""
    Ho = (Hi - k) // s + 1
    Wo = (Wi - k) // s + 1
    G = np.zeros((k * k, Hi * Wi, Ho * Wo), np.float64)
    for i in range(k):
        for j in range(k):
            t = i * k + j
            for ho in range(Ho):
                for wo in range(Wo):
                    G[t, (ho * s + i) * Wi + (wo * s + j), ho * Wo + wo] = 1.0
    return G, Ho, Wo


def _deconv_taps(Hi, Wi, k, s):
    """0/1 scatter matrices for ConvTranspose2d(kernel=k, stride=s, padding=0)."""
    Ho = (Hi - 1) * s + k
    Wo = (Wi - 1) * s + k
    G = np.zeros((k * k, Hi * Wi, Ho * Wo), np.float64)
    for i in range(k):
        for j in range(k):
            t = i * k + j
            for hi in range(Hi):
                for wi in range(Wi):
                    G[t, hi * Wi + wi, (hi * s + i) * Wo + (wi * s + j)] = 1.0
    return G, Ho, Wo


def _layer_matrix(w, kind, k, s, Hi, Wi):
    """Dense (OC*Ho*Wo, IC*Hi*Wi) matrix of one conv / transposed-conv layer."""
    w = np.asarray(w, np.float64)
    if kind == "conv":
        # Conv2d weight (OC, IC, kh, kw) -> per-tap (k*k, OC, IC)
        wt = w.transpose(2, 3, 0, 1).reshape(k * k, w.shape[0], w.shape[1])
        G, Ho, Wo = _conv_taps(Hi, Wi, k, s)
    else:
        # ConvTranspose2d weight (IC, OC, kh, kw) -> per-tap (k*k, OC, IC)
        wt = w.transpose(2, 3, 1, 0).reshape(k * k, w.shape[1], w.shape[0])
        G, Ho, Wo = _deconv_taps(Hi, Wi, k, s)
    # A[(o,q),(i,p)] = sum_t W_t[o,i] * G_t[p,q]
    A = np.einsum("toi,tpq->oqip", wt, G)
    A = A.reshape(wt.shape[1] * Ho * Wo, wt.shape[2] * Hi * Wi)
    return A, Ho, Wo


def fold_network(params, C, H, W):
    """Fold the 7 bias-free linear layers into D (down path) and U (up path)
    around the rank-4 bottleneck (dimr3 output: 1 channel x 2 x 2)."""
    Hi, Wi = H, W
    mats = []
    for name, kind, k, s in _LAYERS:
        A, Hi, Wi = _layer_matrix(params[name], kind, k, s, Hi, Wi)
        mats.append(A)
    down = mats[2] @ mats[1] @ mats[0]            # (4,     C*H*W)
    up = mats[6] @ mats[5] @ mats[4] @ mats[3]    # (Ho*Wo, 4)
    D = jnp.asarray(down, jnp.float32)            # (4, C*H*W)  lane-dense
    U = jnp.asarray(up.T, jnp.float32)            # (4, Ho*Wo)  lane-dense
    return D, U, Hi, Wi


# ------------------------------ fused Pallas kernel ------------------------------

def _folded_forward_kernel(x_ref, d_ref, u_ref, out_ref, logits_ref):
    x = x_ref[...]                                                  # (N, C*H*W)
    # down path (dimr1 -> dimr2 -> dimr3), folded:  (N, CHW) @ (CHW, 4)
    y4 = jnp.dot(x, d_ref[...].T, preferred_element_type=jnp.float32)      # (N, 4)
    # up path (up1 -> up2 -> up3 -> conv), folded:  (N, 4) @ (4, Ho*Wo)
    logits = jnp.dot(y4, u_ref[...], preferred_element_type=jnp.float32)   # (N, P)
    logits_ref[...] = logits   # pre-softmax output (kept for validation only)

    # nn.Softmax() with legacy dim=None -> dim=1 (channel axis).  The final conv
    # has exactly one output channel, so the softmax is identically 1.0.
    out_ref[...] = jnp.ones_like(logits)


def build_classifier(params, N, C, H, W):
    """Returns a jitted forward(x) -> (out_NCHW, logits_NCHW)."""
    D, U, Ho, Wo = fold_network(params, C, H, W)
    P = Ho * Wo
    CHW = C * H * W

    fused = pl.pallas_call(
        _folded_forward_kernel,
        out_shape=(jax.ShapeDtypeStruct((N, P), jnp.float32),   # softmax out (== 1.0)
                   jax.ShapeDtypeStruct((N, P), jnp.float32)),  # logits
        in_specs=[pl.BlockSpec(memory_space=pltpu.MemorySpace.VMEM)] * 3,
        out_specs=(pl.BlockSpec(memory_space=pltpu.MemorySpace.VMEM),
                   pl.BlockSpec(memory_space=pltpu.MemorySpace.VMEM)),
    )

    @jax.jit
    def forward(x):
        # NCHW flattens row-major straight to (N, C*H*W): no transpose needed.
        xf = x.reshape(N, CHW)
        out, logits = fused(xf, D, U)
        return (out.reshape(N, 1, Ho, Wo), logits.reshape(N, 1, Ho, Wo))

    return forward


# ------------------------------- params & reference -------------------------------

def init_params(key, in_channels):
    c = in_channels
    ks = jax.random.split(key, 7)

    def w(k, shape):
        return (0.3 * jax.random.normal(k, shape)).astype(jnp.float32)

    return {
        "dimr1": w(ks[0], (c // 2, c, 1, 1)),       # Conv2d(C,   C/2, k=1, s=2)
        "dimr2": w(ks[1], (c // 4, c // 2, 2, 2)),  # Conv2d(C/2, C/4, k=2, s=2)
        "dimr3": w(ks[2], (1, c // 4, 1, 1)),       # Conv2d(C/4, 1,   k=1, s=2)
        "up1":   w(ks[3], (1, 4, 1, 1)),            # ConvTranspose2d(1, 4,  k=1, s=2)
        "up2":   w(ks[4], (4, 8, 2, 2)),            # ConvTranspose2d(4, 8,  k=2, s=2)
        "up3":   w(ks[5], (8, 16, 5, 5)),           # ConvTranspose2d(8, 16, k=5, s=2)
        "conv":  w(ks[6], (1, 16, 1, 1)),           # Conv2d(16, 1, k=1, s=1)
    }


def reference_logits(x, params):
    """Pure-XLA reference (pre-softmax), independent of the host-side folding."""
    dn = ("NCHW", "OIHW", "NCHW")
    hp = jax.lax.Precision.HIGHEST

    def conv(x, w, s):
        return jax.lax.conv_general_dilated(
            x, w, (s, s), "VALID", dimension_numbers=dn, precision=hp)

    def deconv(x, w, s):
        k = w.shape[-1]
        wf = jnp.flip(w, (-2, -1)).transpose(1, 0, 2, 3)
        return jax.lax.conv_general_dilated(
            x, wf, (1, 1), [(k - 1, k - 1)] * 2, lhs_dilation=(s, s),
            dimension_numbers=dn, precision=hp)

    x = conv(x, params["dimr1"], 2)
    x = conv(x, params["dimr2"], 2)
    x = conv(x, params["dimr3"], 2)
    x = deconv(x, params["up1"], 2)
    x = deconv(x, params["up2"], 2)
    x = deconv(x, params["up3"], 2)
    return conv(x, params["conv"], 1)


if __name__ == "__main__":
    key = jax.random.PRNGKey(0)
    kx, kp = jax.random.split(key)

    N, C, H, W = 2, 8, 16, 16
    x = jax.random.normal(kx, (N, C, H, W), dtype=jnp.float32)
    params = init_params(kp, C)

    forward = build_classifier(params, N, C, H, W)
    out, logits = forward(x)
    out, logits = jax.block_until_ready((out, logits))

    # spatial: 16 -> 8 -> 4 -> 2 -> 3 -> 6 -> 15 -> 15
    assert out.shape == (N, 1, 15, 15), out.shape
    assert logits.shape == (N, 1, 15, 15), logits.shape
    assert bool(jnp.all(jnp.isfinite(out)))

    # nn.Softmax over a single channel is identically 1.0
    assert bool(jnp.allclose(out, 1.0, atol=1e-5))

    # validate the folded linear map against XLA's convolutions on random data
    ref = reference_logits(x, params)
    err = float(jnp.max(jnp.abs(logits - ref)))
    scale = float(jnp.max(jnp.abs(ref)))
    assert err <= 5e-2 * scale + 1e-5, (err, scale)

    print("KERNEL_OK")
</pallas_src>

<mosaic_0001>
module attributes {stable_mosaic.version = 11 : i64} {
  func.func @_folded_forward_kernel(%arg0: memref<2x2048xf32, #tpu.memory_space<vmem>>, %arg1: memref<4x2048xf32, #tpu.memory_space<vmem>>, %arg2: memref<4x225xf32, #tpu.memory_space<vmem>>, %arg3: memref<2x225xf32, #tpu.memory_space<vmem>>, %arg4: memref<2x225xf32, #tpu.memory_space<vmem>>) attributes {dimension_semantics = [], scalar_prefetch = 0 : i64, scratch_operands = 0 : i64, tpu.core_type = #tpu.core_type<tc>} {
    %c0 = arith.constant 0 : index
    %c0_0 = arith.constant 0 : index
    %0 = vector.load %arg0[%c0, %c0_0] : memref<2x2048xf32, #tpu.memory_space<vmem>>, vector<2x2048xf32>
    %c0_1 = arith.constant 0 : index
    %c0_2 = arith.constant 0 : index
    %1 = vector.load %arg1[%c0_1, %c0_2] : memref<4x2048xf32, #tpu.memory_space<vmem>>, vector<4x2048xf32>
    %2 = tpu.transpose %1, [1, 0] : vector<4x2048xf32> -> vector<2048x4xf32>
    %cst = arith.constant dense<0.000000e+00> : vector<2x4xf32>
    %3 = tpu.matmul %0, %2, %cst {dimension_numbers = #tpu.dot_dimension_numbers<[1], [0], [0], [1], [0, 0, 1, 1], [], []>} : vector<2x2048xf32>, vector<2048x4xf32>, vector<2x4xf32> -> vector<2x4xf32>
    %c0_3 = arith.constant 0 : index
    %c0_4 = arith.constant 0 : index
    %4 = vector.load %arg2[%c0_3, %c0_4] : memref<4x225xf32, #tpu.memory_space<vmem>>, vector<4x225xf32>
    %cst_5 = arith.constant dense<0.000000e+00> : vector<2x225xf32>
    %5 = tpu.matmul %3, %4, %cst_5 {dimension_numbers = #tpu.dot_dimension_numbers<[1], [0], [0], [1], [0, 0, 1, 1], [], []>} : vector<2x4xf32>, vector<4x225xf32>, vector<2x225xf32> -> vector<2x225xf32>
    %c0_6 = arith.constant 0 : index
    %c0_7 = arith.constant 0 : index
    %6 = vector.load %arg4[%c0_6, %c0_7] : memref<2x225xf32, #tpu.memory_space<vmem>>, vector<2x225xf32>
    tpu.vector_store %arg4[%c0_6, %c0_7], %5 {strides = array<i32>} : memref<2x225xf32, #tpu.memory_space<vmem>>, vector<2x225xf32>,
    %cst_8 = arith.constant 1.000000e+00 : f32
    %7 = vector.broadcast %cst_8 : f32 to vector<2x225xf32>
    %c0_9 = arith.constant 0 : index
    %c0_10 = arith.constant 0 : index
    %8 = vector.load %arg3[%c0_9, %c0_10] : memref<2x225xf32, #tpu.memory_space<vmem>>, vector<2x225xf32>
    tpu.vector_store %arg3[%c0_9, %c0_10], %7 {strides = array<i32>} : memref<2x225xf32, #tpu.memory_space<vmem>>, vector<2x225xf32>,
    return
  }
}

</mosaic_0001>

<llo_original>
// kernel: forward.1
$region0: #{forward.1}
  #allocation0 [shape = 'u32[]', space=smem, size = 0x4, offset = 0x4, fixed_abs, tag = 'smem constant byte address 0x4 - core index']
  #allocation1 [shape = 'u32[144,128]{1,0:T(1,128)}', space=vmem, size = 0x12000, scoped, tag = 'internal scratch']
  %s0 = inlined_call_operand.vmem [shape: f32[2,2048], index: 0, kind: input, shape index: {}]
  %s1 = inlined_call_operand.vmem [shape: f32[4,2048], index: 1, kind: input, shape index: {}]
  %s2 = inlined_call_operand.vmem [shape: f32[4,225], index: 2, kind: input, shape index: {}]
  %s3 = inlined_call_operand.vmem [shape: f32[2,225], index: 3, kind: output, shape index: {0}]
  %s4 = inlined_call_operand.vmem [shape: f32[2,225], index: 4, kind: output, shape index: {1}]
  %5 = xla_tuple %s3, %s4
  %s6 = sld [smem:[#allocation0]]
  $region30: #{forward.1} parent=0
    _
  %s8 = ssub.s32 1, %s6
  %s9 = scalar_select 0, %s8, %s6
  // Predicated region
  $region2: #{forward.1} parent=0 // pred_check
    _
  $region3: #{forward.1} parent=0 // pred_check_branch
    %11 = sbr.rel (0) target = $region5
  $region4: #{forward.1} parent=0 // pred_region
    _
  $region5: #{forward.1} parent=0 // pred_fallthru
    _
  // Predicated region
  $region6: #{forward.1} parent=0 // pred_check
    _
  $region7: #{forward.1} parent=0 // pred_check_branch
    %13 = sbr.rel (0) target = $region9
  $region8: #{forward.1} parent=0 // pred_region
    _
  $region9: #{forward.1} parent=0 // pred_fallthru
    _
  // Predicated region
  $region10: #{forward.1} parent=0 // pred_check
    _
  $region11: #{forward.1} parent=0 // pred_check_branch
    %15 = sbr.rel (0) target = $region13
  $region12: #{forward.1} parent=0 // pred_region
    _
  $region13: #{forward.1} parent=0 // pred_fallthru
    _
  %v16 = vld [vmem:[%s0] sm:$0xff]
  %v17 = vld [vmem:[%s0 + $0x8] sm:$0xff]
  %v18 = vld [vmem:[%s0 + $0x10] sm:$0xff]
  %v19 = vld [vmem:[%s0 + $0x18] sm:$0xff]
  %v20 = vld [vmem:[%s1] sm:$0xff]
  %v21 = vld [vmem:[%s1 + $0x8] sm:$0xff]
  %v22 = vld [vmem:[%s1 + $0x10] sm:$0xff]
  %v23 = vld [vmem:[%s1 + $0x18] sm:$0xff]
  %v24 = vld [vmem:[%s1 + $0x20] sm:$0xff]
  %v25 = vld [vmem:[%s1 + $0x28] sm:$0xff]
  %v26 = vld [vmem:[%s1 + $0x30] sm:$0xff]
  %v27 = vld [vmem:[%s1 + $0x38] sm:$0xff]
  %v32 = vcombine.high %v16, %v16
  %v34 = vunpack.c.l.s4 1983009808
  %v35 = vunpack.c.0.s8 %v34
  %v36 = vlaneseq
  %v37 = vshrl.u32 %v36, 7
  %v38 = vsub.s32 %v35, %v37
  %v39 = vrot.slane %v16, %v38
  %v41 = vunpack.c.l.s4 1983009808
  %v42 = vunpack.c.0.s8 %v41
  %v43 = vlaneseq
  %v44 = vshrl.u32 %v43, 7
  %v45 = vsub.s32 %v42, %v44
  %v46 = vrot.slane %v32, %v45
  %v47 = vcombine.high %v39, %v39
  %v48 = vcombine.high %v46, %v46
  %v49 = vcombine.high %v17, %v17
  %v51 = vunpack.c.l.s4 1983009808
  %v52 = vunpack.c.0.s8 %v51
  %v53 = vlaneseq
  %v54 = vshrl.u32 %v53, 7
  %v55 = vsub.s32 %v52, %v54
  %v56 = vrot.slane %v17, %v55
  %v58 = vunpack.c.l.s4 1983009808
  %v59 = vunpack.c.0.s8 %v58
  %v60 = vlaneseq
  %v61 = vshrl.u32 %v60, 7
  %v62 = vsub.s32 %v59, %v61
  %v63 = vrot.slane %v49, %v62
  %v64 = vcombine.high %v56, %v56
  %v65 = vcombine.high %v63, %v63
  %v66 = vcombine.high %v18, %v18
  %v68 = vunpack.c.l.s4 1983009808
  %v69 = vunpack.c.0.s8 %v68
  %v70 = vlaneseq
  %v71 = vshrl.u32 %v70, 7
  %v72 = vsub.s32 %v69, %v71
  %v73 = vrot.slane %v18, %v72
  %v75 = vunpack.c.l.s4 1983009808
  %v76 = vunpack.c.0.s8 %v75
  %v77 = vlaneseq
  %v78 = vshrl.u32 %v77, 7
  %v79 = vsub.s32 %v76, %v78
  %v80 = vrot.slane %v66, %v79
  %v81 = vcombine.high %v73, %v73
  %v82 = vcombine.high %v80, %v80
  %v83 = vcombine.high %v19, %v19
  %v85 = vunpack.c.l.s4 1983009808
  %v86 = vunpack.c.0.s8 %v85
  %v87 = vlaneseq
  %v88 = vshrl.u32 %v87, 7
  %v89 = vsub.s32 %v86, %v88
  %v90 = vrot.slane %v19, %v89
  %v92 = vunpack.c.l.s4 1983009808
  %v93 = vunpack.c.0.s8 %v92
  %v94 = vlaneseq
  %v95 = vshrl.u32 %v94, 7
  %v96 = vsub.s32 %v93, %v95
  %v97 = vrot.slane %v83, %v96
  %v98 = vcombine.high %v90, %v90
  %v99 = vcombine.high %v97, %v97
  %v124 = vcombine.high %v20, %v20
  %v125 = vcombine.high %v21, %v21
  %v126 = vcombine.high %v22, %v22
  %v127 = vcombine.high %v23, %v23
  %v128 = vcombine.high %v24, %v24
  %v129 = vcombine.high %v25, %v25
  %v130 = vcombine.high %v26, %v26
  %v131 = vcombine.high %v27, %v27
  %140 = vmatprep.subr.mxu0 0.0
  %141 = vmatpush1.xpose.msra.mxu0 0.0
  %142 = vmatprep.subr.mxu0 0.0
  %143 = vmatpush1.xpose.msra.mxu0 0.0
  %144 = vmatprep.subr.mxu0 0.0
  %145 = vmatpush1.xpose.msra.mxu0 0.0
  %146 = vmatprep.subr.mxu0 0.0
  %147 = vmatpush1.xpose.msra.mxu0 0.0
  %148 = vmatprep.subr.mxu0 0.0
  %149 = vmatpush1.xpose.msra.mxu0 0.0
  %150 = vmatprep.subr.mxu0 0.0
  %151 = vmatpush1.xpose.msra.mxu0 0.0
  %152 = vmatprep.subr.mxu0 0.0
  %153 = vmatpush1.xpose.msra.mxu0 0.0
  %154 = vmatprep.subr.mxu0 0.0
  %155 = vmatpush1.xpose.msra.mxu0 0.0
  %156 = vmatprep.subr.mxu0 0.0
  %157 = vmatpush1.xpose.msra.mxu0 0.0
  %158 = vmatprep.subr.mxu0 0.0
  %159 = vmatpush1.xpose.msra.mxu0 0.0
  %160 = vmatprep.subr.mxu0 0.0
  %161 = vmatpush1.xpose.msra.mxu0 0.0
  %162 = vmatprep.subr.mxu0 0.0
  %163 = vmatpush1.xpose.msra.mxu0 0.0
  %164 = vmatprep.subr.mxu0 0.0
  %165 = vmatpush1.xpose.msra.mxu0 0.0
  %166 = vmatprep.subr.mxu0 0.0
  %167 = vmatpush1.xpose.msra.mxu0 0.0
  %168 = vmatprep.subr.mxu0 0.0
  %169 = vmatpush1.xpose.msra.mxu0 0.0
  %170 = vmatprep.subr.mxu0 %v124
  %171 = vmatpush1.xpose.msra.mxu0 %v20
  %172 = vmatprep.subr.mxu0 0.0
  %173 = vmatpush2.xpose.msra.mxu0 0.0
  %174 = vmatprep.subr.mxu0 0.0
  %175 = vmatpush2.xpose.msra.mxu0 0.0
  %176 = vmatprep.subr.mxu0 0.0
  %177 = vmatpush2.xpose.msra.mxu0 0.0
  %178 = vmatprep.subr.mxu0 0.0
  %179 = vmatpush2.xpose.msra.mxu0 0.0
  %180 = vmatprep.subr.mxu0 0.0
  %181 = vmatpush2.xpose.msra.mxu0 0.0
  %182 = vmatprep.subr.mxu0 0.0
  %183 = vmatpush2.xpose.msra.mxu0 0.0
  %184 = vmatprep.subr.mxu0 0.0
  %185 = vmatpush2.xpose.msra.mxu0 0.0
  %186 = vmatprep.subr.mxu0 0.0
  %187 = vmatpush2.xpose.msra.mxu0 0.0
  %188 = vmatprep.subr.mxu0 0.0
  %189 = vmatpush2.xpose.msra.mxu0 0.0
  %190 = vmatprep.subr.mxu0 0.0
  %191 = vmatpush2.xpose.msra.mxu0 0.0
  %192 = vmatprep.subr.mxu0 0.0
  %193 = vmatpush2.xpose.msra.mxu0 0.0
  %194 = vmatprep.subr.mxu0 0.0
  %195 = vmatpush2.xpose.msra.mxu0 0.0
  %196 = vmatprep.subr.mxu0 0.0
  %197 = vmatpush2.xpose.msra.mxu0 0.0
  %198 = vmatprep.subr.mxu0 0.0
  %199 = vmatpush2.xpose.msra.mxu0 0.0
  %200 = vmatprep.subr.mxu0 0.0
  %201 = vmatpush2.xpose.msra.mxu0 0.0
  %202 = vmatprep.subr.mxu0 0.0
  %203 = vmatpush2.xpose.msra.mxu0 0.0
  %204 = vmatprep.mubr.f32.mxu0 %v47
  %205 = vmatmul.mubr.f32.gmra.mxu0 %v39
  %v206 = vpop.f32.mrf.mxu0
  %v207 = vadd.f32 0.0, %v206
  %v208 = vpop.f32.mrf.mxu0
  %209 = vdwg.mxu0
  %210 = vmatprep.subr.mxu0 0.0
  %211 = vmatpush1.xpose.msra.mxu0 0.0
  %212 = vmatprep.subr.mxu0 0.0
  %213 = vmatpush1.xpose.msra.mxu0 0.0
  %214 = vmatprep.subr.mxu0 0.0
  %215 = vmatpush1.xpose.msra.mxu0 0.0
  %216 = vmatprep.subr.mxu0 0.0
  %217 = vmatpush1.xpose.msra.mxu0 0.0
  %218 = vmatprep.subr.mxu0 0.0
  %219 = vmatpush1.xpose.msra.mxu0 0.0
  %220 = vmatprep.subr.mxu0 0.0
  %221 = vmatpush1.xpose.msra.mxu0 0.0
  %222 = vmatprep.subr.mxu0 0.0
  %223 = vmatpush1.xpose.msra.mxu0 0.0
  %224 = vmatprep.subr.mxu0 0.0
  %225 = vmatpush1.xpose.msra.mxu0 0.0
  %226 = vmatprep.subr.mxu0 0.0
  %227 = vmatpush1.xpose.msra.mxu0 0.0
  %228 = vmatprep.subr.mxu0 0.0
  %229 = vmatpush1.xpose.msra.mxu0 0.0
  %230 = vmatprep.subr.mxu0 0.0
  %231 = vmatpush1.xpose.msra.mxu0 0.0
  %232 = vmatprep.subr.mxu0 0.0
  %233 = vmatpush1.xpose.msra.mxu0 0.0
  %234 = vmatprep.subr.mxu0 0.0
  %235 = vmatpush1.xpose.msra.mxu0 0.0
  %236 = vmatprep.subr.mxu0 0.0
  %237 = vmatpush1.xpose.msra.mxu0 0.0
  %238 = vmatprep.subr.mxu0 0.0
  %239 = vmatpush1.xpose.msra.mxu0 0.0
  %240 = vmatprep.subr.mxu0 %v125
  %241 = vmatpush1.xpose.msra.mxu0 %v21
  %242 = vmatprep.subr.mxu0 0.0
  %243 = vmatpush2.xpose.msra.mxu0 0.0
  %244 = vmatprep.subr.mxu0 0.0
  %245 = vmatpush2.xpose.msra.mxu0 0.0
  %246 = vmatprep.subr.mxu0 0.0
  %247 = vmatpush2.xpose.msra.mxu0 0.0
  %248 = vmatprep.subr.mxu0 0.0
  %249 = vmatpush2.xpose.msra.mxu0 0.0
  %250 = vmatprep.subr.mxu0 0.0
  %251 = vmatpush2.xpose.msra.mxu0 0.0
  %252 = vmatprep.subr.mxu0 0.0
  %253 = vmatpush2.xpose.msra.mxu0 0.0
  %254 = vmatprep.subr.mxu0 0.0
  %255 = vmatpush2.xpose.msra.mxu0 0.0
  %256 = vmatprep.subr.mxu0 0.0
  %257 = vmatpush2.xpose.msra.mxu0 0.0
  %258 = vmatprep.subr.mxu0 0.0
  %259 = vmatpush2.xpose.msra.mxu0 0.0
  %260 = vmatprep.subr.mxu0 0.0
  %261 = vmatpush2.xpose.msra.mxu0 0.0
  %262 = vmatprep.subr.mxu0 0.0
  %263 = vmatpush2.xpose.msra.mxu0 0.0
  %264 = vmatprep.subr.mxu0 0.0
  %265 = vmatpush2.xpose.msra.mxu0 0.0
  %266 = vmatprep.subr.mxu0 0.0
  %267 = vmatpush2.xpose.msra.mxu0 0.0
  %268 = vmatprep.subr.mxu0 0.0
  %269 = vmatpush2.xpose.msra.mxu0 0.0
  %270 = vmatprep.subr.mxu0 0.0
  %271 = vmatpush2.xpose.msra.mxu0 0.0
  %272 = vmatprep.subr.mxu0 0.0
  %273 = vmatpush2.xpose.msra.mxu0 0.0
  %274 = vmatprep.mubr.f32.mxu0 %v48
  %275 = vmatmul.mubr.f32.gmra.mxu0 %v46
  %v276 = vpop.f32.mrf.mxu0
  %v277 = vadd.f32 %v207, %v276
  %v278 = vpop.f32.mrf.mxu0
  %279 = vdwg.mxu0
  %280 = vmatprep.subr.mxu0 0.0
  %281 = vmatpush1.xpose.msra.mxu0 0.0
  %282 = vmatprep.subr.mxu0 0.0
  %283 = vmatpush1.xpose.msra.mxu0 0.0
  %284 = vmatprep.subr.mxu0 0.0
  %285 = vmatpush1.xpose.msra.mxu0 0.0
  %286 = vmatprep.subr.mxu0 0.0
  %287 = vmatpush1.xpose.msra.mxu0 0.0
  %288 = vmatprep.subr.mxu0 0.0
  %289 = vmatpush1.xpose.msra.mxu0 0.0
  %290 = vmatprep.subr.mxu0 0.0
  %291 = vmatpush1.xpose.msra.mxu0 0.0
  %292 = vmatprep.subr.mxu0 0.0
  %293 = vmatpush1.xpose.msra.mxu0 0.0
  %294 = vmatprep.subr.mxu0 0.0
  %295 = vmatpush1.xpose.msra.mxu0 0.0
  %296 = vmatprep.subr.mxu0 0.0
  %297 = vmatpush1.xpose.msra.mxu0 0.0
  %298 = vmatprep.subr.mxu0 0.0
  %299 = vmatpush1.xpose.msra.mxu0 0.0
  %300 = vmatprep.subr.mxu0 0.0
  %301 = vmatpush1.xpose.msra.mxu0 0.0
  %302 = vmatprep.subr.mxu0 0.0
  %303 = vmatpush1.xpose.msra.mxu0 0.0
  %304 = vmatprep.subr.mxu0 0.0
  %305 = vmatpush1.xpose.msra.mxu0 0.0
  %306 = vmatprep.subr.mxu0 0.0
  %307 = vmatpush1.xpose.msra.mxu0 0.0
  %308 = vmatprep.subr.mxu0 0.0
  %309 = vmatpush1.xpose.msra.mxu0 0.0
  %310 = vmatprep.subr.mxu0 %v126
  %311 = vmatpush1.xpose.msra.mxu0 %v22
  %312 = vmatprep.subr.mxu0 0.0
  %313 = vmatpush2.xpose.msra.mxu0 0.0
  %314 = vmatprep.subr.mxu0 0.0
  %315 = vmatpush2.xpose.msra.mxu0 0.0
  %316 = vmatprep.subr.mxu0 0.0
  %317 = vmatpush2.xpose.msra.mxu0 0.0
  %318 = vmatprep.subr.mxu0 0.0
  %319 = vmatpush2.xpose.msra.mxu0 0.0
  %320 = vmatprep.subr.mxu0 0.0
  %321 = vmatpush2.xpose.msra.mxu0 0.0
  %322 = vmatprep.subr.mxu0 0.0
  %323 = vmatpush2.xpose.msra.mxu0 0.0
  %324 = vmatprep.subr.mxu0 0.0
  %325 = vmatpush2.xpose.msra.mxu0 0.0
  %326 = vmatprep.subr.mxu0 0.0
  %327 = vmatpush2.xpose.msra.mxu0 0.0
  %328 = vmatprep.subr.mxu0 0.0
  %329 = vmatpush2.xpose.msra.mxu0 0.0
  %330 = vmatprep.subr.mxu0 0.0
  %331 = vmatpush2.xpose.msra.mxu0 0.0
  %332 = vmatprep.subr.mxu0 0.0
  %333 = vmatpush2.xpose.msra.mxu0 0.0
  %334 = vmatprep.subr.mxu0 0.0
  %335 = vmatpush2.xpose.msra.mxu0 0.0
  %336 = vmatprep.subr.mxu0 0.0
  %337 = vmatpush2.xpose.msra.mxu0 0.0
  %338 = vmatprep.subr.mxu0 0.0
  %339 = vmatpush2.xpose.msra.mxu0 0.0
  %340 = vmatprep.subr.mxu0 0.0
  %341 = vmatpush2.xpose.msra.mxu0 0.0
  %342 = vmatprep.subr.mxu0 0.0
  %343 = vmatpush2.xpose.msra.mxu0 0.0
  %344 = vmatprep.mubr.f32.mxu0 %v64
  %345 = vmatmul.mubr.f32.gmra.mxu0 %v56
  %v346 = vpop.f32.mrf.mxu0
  %v347 = vadd.f32 %v277, %v346
  %v348 = vpop.f32.mrf.mxu0
  %349 = vdwg.mxu0
  %350 = vmatprep.subr.mxu0 0.0
  %351 = vmatpush1.xpose.msra.mxu0 0.0
  %352 = vmatprep.subr.mxu0 0.0
  %353 = vmatpush1.xpose.msra.mxu0 0.0
  %354 = vmatprep.subr.mxu0 0.0
  %355 = vmatpush1.xpose.msra.mxu0 0.0
  %356 = vmatprep.subr.mxu0 0.0
  %357 = vmatpush1.xpose.msra.mxu0 0.0
  %358 = vmatprep.subr.mxu0 0.0
  %359 = vmatpush1.xpose.msra.mxu0 0.0
  %360 = vmatprep.subr.mxu0 0.0
  %361 = vmatpush1.xpose.msra.mxu0 0.0
  %362 = vmatprep.subr.mxu0 0.0
  %363 = vmatpush1.xpose.msra.mxu0 0.0
  %364 = vmatprep.subr.mxu0 0.0
  %365 = vmatpush1.xpose.msra.mxu0 0.0
  %366 = vmatprep.subr.mxu0 0.0
  %367 = vmatpush1.xpose.msra.mxu0 0.0
  %368 = vmatprep.subr.mxu0 0.0
  %369 = vmatpush1.xpose.msra.mxu0 0.0
  %370 = vmatprep.subr.mxu0 0.0
  %371 = vmatpush1.xpose.msra.mxu0 0.0
  %372 = vmatprep.subr.mxu0 0.0
  %373 = vmatpush1.xpose.msra.mxu0 0.0
  %374 = vmatprep.subr.mxu0 0.0
  %375 = vmatpush1.xpose.msra.mxu0 0.0
  %376 = vmatprep.subr.mxu0 0.0
  %377 = vmatpush1.xpose.msra.mxu0 0.0
  %378 = vmatprep.subr.mxu0 0.0
  %379 = vmatpush1.xpose.msra.mxu0 0.0
  %380 = vmatprep.subr.mxu0 %v127
  %381 = vmatpush1.xpose.msra.mxu0 %v23
  %382 = vmatprep.subr.mxu0 0.0
  %383 = vmatpush2.xpose.msra.mxu0 0.0
  %384 = vmatprep.subr.mxu0 0.0
  %385 = vmatpush2.xpose.msra.mxu0 0.0
  %386 = vmatprep.subr.mxu0 0.0
  %387 = vmatpush2.xpose.msra.mxu0 0.0
  %388 = vmatprep.subr.mxu0 0.0
  %389 = vmatpush2.xpose.msra.mxu0 0.0
  %390 = vmatprep.subr.mxu0 0.0
  %391 = vmatpush2.xpose.msra.mxu0 0.0
  %392 = vmatprep.subr.mxu0 0.0
  %393 = vmatpush2.xpose.msra.mxu0 0.0
  %394 = vmatprep.subr.mxu0 0.0
  %395 = vmatpush2.xpose.msra.mxu0 0.0
  %396 = vmatprep.subr.mxu0 0.0
  %397 = vmatpush2.xpose.msra.mxu0 0.0
  %398 = vmatprep.subr.mxu0 0.0
  %399 = vmatpush2.xpose.msra.mxu0 0.0
  %400 = vmatprep.subr.mxu0 0.0
  %401 = vmatpush2.xpose.msra.mxu0 0.0
  %402 = vmatprep.subr.mxu0 0.0
  %403 = vmatpush2.xpose.msra.mxu0 0.0
  %404 = vmatprep.subr.mxu0 0.0
  %405 = vmatpush2.xpose.msra.mxu0 0.0
  %406 = vmatprep.subr.mxu0 0.0
  %407 = vmatpush2.xpose.msra.mxu0 0.0
  %408 = vmatprep.subr.mxu0 0.0
  %409 = vmatpush2.xpose.msra.mxu0 0.0
  %410 = vmatprep.subr.mxu0 0.0
  %411 = vmatpush2.xpose.msra.mxu0 0.0
  %412 = vmatprep.subr.mxu0 0.0
  %413 = vmatpush2.xpose.msra.mxu0 0.0
  %414 = vmatprep.mubr.f32.mxu0 %v65
  %415 = vmatmul.mubr.f32.gmra.mxu0 %v63
  %v416 = vpop.f32.mrf.mxu0
  %v417 = vadd.f32 %v347, %v416
  %v418 = vpop.f32.mrf.mxu0
  %419 = vdwg.mxu0
  %420 = vmatprep.subr.mxu0 0.0
  %421 = vmatpush1.xpose.msra.mxu0 0.0
  %422 = vmatprep.subr.mxu0 0.0
  %423 = vmatpush1.xpose.msra.mxu0 0.0
  %424 = vmatprep.subr.mxu0 0.0
  %425 = vmatpush1.xpose.msra.mxu0 0.0
  %426 = vmatprep.subr.mxu0 0.0
  %427 = vmatpush1.xpose.msra.mxu0 0.0
  %428 = vmatprep.subr.mxu0 0.0
  %429 = vmatpush1.xpose.msra.mxu0 0.0
  %430 = vmatprep.subr.mxu0 0.0
  %431 = vmatpush1.xpose.msra.mxu0 0.0
  %432 = vmatprep.subr.mxu0 0.0
  %433 = vmatpush1.xpose.msra.mxu0 0.0
  %434 = vmatprep.subr.mxu0 0.0
  %435 = vmatpush1.xpose.msra.mxu0 0.0
  %436 = vmatprep.subr.mxu0 0.0
  %437 = vmatpush1.xpose.msra.mxu0 0.0
  %438 = vmatprep.subr.mxu0 0.0
  %439 = vmatpush1.xpose.msra.mxu0 0.0
  %440 = vmatprep.subr.mxu0 0.0
  %441 = vmatpush1.xpose.msra.mxu0 0.0
  %442 = vmatprep.subr.mxu0 0.0
  %443 = vmatpush1.xpose.msra.mxu0 0.0
  %444 = vmatprep.subr.mxu0 0.0
  %445 = vmatpush1.xpose.msra.mxu0 0.0
  %446 = vmatprep.subr.mxu0 0.0
  %447 = vmatpush1.xpose.msra.mxu0 0.0
  %448 = vmatprep.subr.mxu0 0.0
  %449 = vmatpush1.xpose.msra.mxu0 0.0
  %450 = vmatprep.subr.mxu0 %v128
  %451 = vmatpush1.xpose.msra.mxu0 %v24
  %452 = vmatprep.subr.mxu0 0.0
  %453 = vmatpush2.xpose.msra.mxu0 0.0
  %454 = vmatprep.subr.mxu0 0.0
  %455 = vmatpush2.xpose.msra.mxu0 0.0
  %456 = vmatprep.subr.mxu0 0.0
  %457 = vmatpush2.xpose.msra.mxu0 0.0
  %458 = vmatprep.subr.mxu0 0.0
  %459 = vmatpush2.xpose.msra.mxu0 0.0
  %460 = vmatprep.subr.mxu0 0.0
  %461 = vmatpush2.xpose.msra.mxu0 0.0
  %462 = vmatprep.subr.mxu0 0.0
  %463 = vmatpush2.xpose.msra.mxu0 0.0
  %464 = vmatprep.subr.mxu0 0.0
  %465 = vmatpush2.xpose.msra.mxu0 0.0
  %466 = vmatprep.subr.mxu0 0.0
  %467 = vmatpush2.xpose.msra.mxu0 0.0
  %468 = vmatprep.subr.mxu0 0.0
  %469 = vmatpush2.xpose.msra.mxu0 0.0
  %470 = vmatprep.subr.mxu0 0.0
  %471 = vmatpush2.xpose.msra.mxu0 0.0
  %472 = vmatprep.subr.mxu0 0.0
  %473 = vmatpush2.xpose.msra.mxu0 0.0
  %474 = vmatprep.subr.mxu0 0.0
  %475 = vmatpush2.xpose.msra.mxu0 0.0
  %476 = vmatprep.subr.mxu0 0.0
  %477 = vmatpush2.xpose.msra.mxu0 0.0
  %478 = vmatprep.subr.mxu0 0.0
  %479 = vmatpush2.xpose.msra.mxu0 0.0
  %480 = vmatprep.subr.mxu0 0.0
  %481 = vmatpush2.xpose.msra.mxu0 0.0
  %482 = vmatprep.subr.mxu0 0.0
  %483 = vmatpush2.xpose.msra.mxu0 0.0
  %484 = vmatprep.mubr.f32.mxu0 %v81
  %485 = vmatmul.mubr.f32.gmra.mxu0 %v73
  %v486 = vpop.f32.mrf.mxu0
  %v487 = vadd.f32 %v417, %v486
  %v488 = vpop.f32.mrf.mxu0
  %489 = vdwg.mxu0
  %490 = vmatprep.subr.mxu0 0.0
  %491 = vmatpush1.xpose.msra.mxu0 0.0
  %492 = vmatprep.subr.mxu0 0.0
  %493 = vmatpush1.xpose.msra.mxu0 0.0
  %494 = vmatprep.subr.mxu0 0.0
  %495 = vmatpush1.xpose.msra.mxu0 0.0
  %496 = vmatprep.subr.mxu0 0.0
  %497 = vmatpush1.xpose.msra.mxu0 0.0
  %498 = vmatprep.subr.mxu0 0.0
  %499 = vmatpush1.xpose.msra.mxu0 0.0
  %500 = vmatprep.subr.mxu0 0.0
  %501 = vmatpush1.xpose.msra.mxu0 0.0
  %502 = vmatprep.subr.mxu0 0.0
  %503 = vmatpush1.xpose.msra.mxu0 0.0
  %504 = vmatprep.subr.mxu0 0.0
  %505 = vmatpush1.xpose.msra.mxu0 0.0
  %506 = vmatprep.subr.mxu0 0.0
  %507 = vmatpush1.xpose.msra.mxu0 0.0
  %508 = vmatprep.subr.mxu0 0.0
  %509 = vmatpush1.xpose.msra.mxu0 0.0
  %510 = vmatprep.subr.mxu0 0.0
  %511 = vmatpush1.xpose.msra.mxu0 0.0
  %512 = vmatprep.subr.mxu0 0.0
  %513 = vmatpush1.xpose.msra.mxu0 0.0
  %514 = vmatprep.subr.mxu0 0.0
  %515 = vmatpush1.xpose.msra.mxu0 0.0
  %516 = vmatprep.subr.mxu0 0.0
  %517 = vmatpush1.xpose.msra.mxu0 0.0
  %518 = vmatprep.subr.mxu0 0.0
  %519 = vmatpush1.xpose.msra.mxu0 0.0
  %520 = vmatprep.subr.mxu0 %v129
  %521 = vmatpush1.xpose.msra.mxu0 %v25
  %522 = vmatprep.subr.mxu0 0.0
  %523 = vmatpush2.xpose.msra.mxu0 0.0
  %524 = vmatprep.subr.mxu0 0.0
  %525 = vmatpush2.xpose.msra.mxu0 0.0
  %526 = vmatprep.subr.mxu0 0.0
  %527 = vmatpush2.xpose.msra.mxu0 0.0
  %528 = vmatprep.subr.mxu0 0.0
  %529 = vmatpush2.xpose.msra.mxu0 0.0
  %530 = vmatprep.subr.mxu0 0.0
  %531 = vmatpush2.xpose.msra.mxu0 0.0
  %532 = vmatprep.subr.mxu0 0.0
  %533 = vmatpush2.xpose.msra.mxu0 0.0
  %534 = vmatprep.subr.mxu0 0.0
  %535 = vmatpush2.xpose.msra.mxu0 0.0
  %536 = vmatprep.subr.mxu0 0.0
  %537 = vmatpush2.xpose.msra.mxu0 0.0
  %538 = vmatprep.subr.mxu0 0.0
  %539 = vmatpush2.xpose.msra.mxu0 0.0
  %540 = vmatprep.subr.mxu0 0.0
  %541 = vmatpush2.xpose.msra.mxu0 0.0
  %542 = vmatprep.subr.mxu0 0.0
  %543 = vmatpush2.xpose.msra.mxu0 0.0
  %544 = vmatprep.subr.mxu0 0.0
  %545 = vmatpush2.xpose.msra.mxu0 0.0
  %546 = vmatprep.subr.mxu0 0.0
  %547 = vmatpush2.xpose.msra.mxu0 0.0
  %548 = vmatprep.subr.mxu0 0.0
  %549 = vmatpush2.xpose.msra.mxu0 0.0
  %550 = vmatprep.subr.mxu0 0.0
  %551 = vmatpush2.xpose.msra.mxu0 0.0
  %552 = vmatprep.subr.mxu0 0.0
  %553 = vmatpush2.xpose.msra.mxu0 0.0
  %554 = vmatprep.mubr.f32.mxu0 %v82
  %555 = vmatmul.mubr.f32.gmra.mxu0 %v80
  %v556 = vpop.f32.mrf.mxu0
  %v557 = vadd.f32 %v487, %v556
  %v558 = vpop.f32.mrf.mxu0
  %559 = vdwg.mxu0
  %560 = vmatprep.subr.mxu0 0.0
  %561 = vmatpush1.xpose.msra.mxu0 0.0
  %562 = vmatprep.subr.mxu0 0.0
  %563 = vmatpush1.xpose.msra.mxu0 0.0
  %564 = vmatprep.subr.mxu0 0.0
  %565 = vmatpush1.xpose.msra.mxu0 0.0
  %566 = vmatprep.subr.mxu0 0.0
  %567 = vmatpush1.xpose.msra.mxu0 0.0
  %568 = vmatprep.subr.mxu0 0.0
  %569 = vmatpush1.xpose.msra.mxu0 0.0
  %570 = vmatprep.subr.mxu0 0.0
  %571 = vmatpush1.xpose.msra.mxu0 0.0
  %572 = vmatprep.subr.mxu0 0.0
  %573 = vmatpush1.xpose.msra.mxu0 0.0
  %574 = vmatprep.subr.mxu0 0.0
  %575 = vmatpush1.xpose.msra.mxu0 0.0
  %576 = vmatprep.subr.mxu0 0.0
  %577 = vmatpush1.xpose.msra.mxu0 0.0
  %578 = vmatprep.subr.mxu0 0.0
  %579 = vmatpush1.xpose.msra.mxu0 0.0
  %580 = vmatprep.subr.mxu0 0.0
  %581 = vmatpush1.xpose.msra.mxu0 0.0
  %582 = vmatprep.subr.mxu0 0.0
  %583 = vmatpush1.xpose.msra.mxu0 0.0
  %584 = vmatprep.subr.mxu0 0.0
  %585 = vmatpush1.xpose.msra.mxu0 0.0
  %586 = vmatprep.subr.mxu0 0.0
  %587 = vmatpush1.xpose.msra.mxu0 0.0
  %588 = vmatprep.subr.mxu0 0.0
  %589 = vmatpush1.xpose.msra.mxu0 0.0
  %590 = vmatprep.subr.mxu0 %v130
  %591 = vmatpush1.xpose.msra.mxu0 %v26
  %592 = vmatprep.subr.mxu0 0.0
  %593 = vmatpush2.xpose.msra.mxu0 0.0
  %594 = vmatprep.subr.mxu0 0.0
  %595 = vmatpush2.xpose.msra.mxu0 0.0
  %596 = vmatprep.subr.mxu0 0.0
  %597 = vmatpush2.xpose.msra.mxu0 0.0
  %598 = vmatprep.subr.mxu0 0.0
  %599 = vmatpush2.xpose.msra.mxu0 0.0
  %600 = vmatprep.subr.mxu0 0.0
  %601 = vmatpush2.xpose.msra.mxu0 0.0
  %602 = vmatprep.subr.mxu0 0.0
  %603 = vmatpush2.xpose.msra.mxu0 0.0
  %604 = vmatprep.subr.mxu0 0.0
  %605 = vmatpush2.xpose.msra.mxu0 0.0
  %606 = vmatprep.subr.mxu0 0.0
  %607 = vmatpush2.xpose.msra.mxu0 0.0
  %608 = vmatprep.subr.mxu0 0.0
  %609 = vmatpush2.xpose.msra.mxu0 0.0
  %610 = vmatprep.subr.mxu0 0.0
  %611 = vmatpush2.xpose.msra.mxu0 0.0
  %612 = vmatprep.subr.mxu0 0.0
  %613 = vmatpush2.xpose.msra.mxu0 0.0
  %614 = vmatprep.subr.mxu0 0.0
  %615 = vmatpush2.xpose.msra.mxu0 0.0
  %616 = vmatprep.subr.mxu0 0.0
  %617 = vmatpush2.xpose.msra.mxu0 0.0
  %618 = vmatprep.subr.mxu0 0.0
  %619 = vmatpush2.xpose.msra.mxu0 0.0
  %620 = vmatprep.subr.mxu0 0.0
  %621 = vmatpush2.xpose.msra.mxu0 0.0
  %622 = vmatprep.subr.mxu0 0.0
  %623 = vmatpush2.xpose.msra.mxu0 0.0
  %624 = vmatprep.mubr.f32.mxu0 %v98
  %625 = vmatmul.mubr.f32.gmra.mxu0 %v90
  %v626 = vpop.f32.mrf.mxu0
  %v627 = vadd.f32 %v557, %v626
  %v628 = vpop.f32.mrf.mxu0
  %629 = vdwg.mxu0
  %630 = vmatprep.subr.mxu0 0.0
  %631 = vmatpush1.xpose.msra.mxu0 0.0
  %632 = vmatprep.subr.mxu0 0.0
  %633 = vmatpush1.xpose.msra.mxu0 0.0
  %634 = vmatprep.subr.mxu0 0.0
  %635 = vmatpush1.xpose.msra.mxu0 0.0
  %636 = vmatprep.subr.mxu0 0.0
  %637 = vmatpush1.xpose.msra.mxu0 0.0
  %638 = vmatprep.subr.mxu0 0.0
  %639 = vmatpush1.xpose.msra.mxu0 0.0
  %640 = vmatprep.subr.mxu0 0.0
  %641 = vmatpush1.xpose.msra.mxu0 0.0
  %642 = vmatprep.subr.mxu0 0.0
  %643 = vmatpush1.xpose.msra.mxu0 0.0
  %644 = vmatprep.subr.mxu0 0.0
  %645 = vmatpush1.xpose.msra.mxu0 0.0
  %646 = vmatprep.subr.mxu0 0.0
  %647 = vmatpush1.xpose.msra.mxu0 0.0
  %648 = vmatprep.subr.mxu0 0.0
  %649 = vmatpush1.xpose.msra.mxu0 0.0
  %650 = vmatprep.subr.mxu0 0.0
  %651 = vmatpush1.xpose.msra.mxu0 0.0
  %652 = vmatprep.subr.mxu0 0.0
  %653 = vmatpush1.xpose.msra.mxu0 0.0
  %654 = vmatprep.subr.mxu0 0.0
  %655 = vmatpush1.xpose.msra.mxu0 0.0
  %656 = vmatprep.subr.mxu0 0.0
  %657 = vmatpush1.xpose.msra.mxu0 0.0
  %658 = vmatprep.subr.mxu0 0.0
  %659 = vmatpush1.xpose.msra.mxu0 0.0
  %660 = vmatprep.subr.mxu0 %v131
  %661 = vmatpush1.xpose.msra.mxu0 %v27
  %662 = vmatprep.subr.mxu0 0.0
  %663 = vmatpush2.xpose.msra.mxu0 0.0
  %664 = vmatprep.subr.mxu0 0.0
  %665 = vmatpush2.xpose.msra.mxu0 0.0
  %666 = vmatprep.subr.mxu0 0.0
  %667 = vmatpush2.xpose.msra.mxu0 0.0
  %668 = vmatprep.subr.mxu0 0.0
  %669 = vmatpush2.xpose.msra.mxu0 0.0
  %670 = vmatprep.subr.mxu0 0.0
  %671 = vmatpush2.xpose.msra.mxu0 0.0
  %672 = vmatprep.subr.mxu0 0.0
  %673 = vmatpush2.xpose.msra.mxu0 0.0
  %674 = vmatprep.subr.mxu0 0.0
  %675 = vmatpush2.xpose.msra.mxu0 0.0
  %676 = vmatprep.subr.mxu0 0.0
  %677 = vmatpush2.xpose.msra.mxu0 0.0
  %678 = vmatprep.subr.mxu0 0.0
  %679 = vmatpush2.xpose.msra.mxu0 0.0
  %680 = vmatprep.subr.mxu0 0.0
  %681 = vmatpush2.xpose.msra.mxu0 0.0
  %682 = vmatprep.subr.mxu0 0.0
  %683 = vmatpush2.xpose.msra.mxu0 0.0
  %684 = vmatprep.subr.mxu0 0.0
  %685 = vmatpush2.xpose.msra.mxu0 0.0
  %686 = vmatprep.subr.mxu0 0.0
  %687 = vmatpush2.xpose.msra.mxu0 0.0
  %688 = vmatprep.subr.mxu0 0.0
  %689 = vmatpush2.xpose.msra.mxu0 0.0
  %690 = vmatprep.subr.mxu0 0.0
  %691 = vmatpush2.xpose.msra.mxu0 0.0
  %692 = vmatprep.subr.mxu0 0.0
  %693 = vmatpush2.xpose.msra.mxu0 0.0
  %694 = vmatprep.mubr.f32.mxu0 %v99
  %695 = vmatmul.mubr.f32.gmra.mxu0 %v97
  %v696 = vpop.f32.mrf.mxu0
  %v697 = vadd.f32 %v627, %v696
  %v698 = vpop.f32.mrf.mxu0
  %699 = vdwg.mxu0
  %v700 = vld [vmem:[%s2] sm:$0xff]
  %v702 = vcombine.high %v700, %v700
  %vm703 = vcmask 31744
  %v705 = vsel %vm703, %v697, 0
  %vm707 = vcmask 1043456
  %v708 = vsel %vm707, %v700, 0
  %v710 = vsel %vm707, %v702, 0
  %712 = vmatprep.subr.mxu0 0.0
  %713 = vmatpush1.msra.mxu0 0.0
  %714 = vmatprep.subr.mxu0 0.0
  %715 = vmatpush1.msra.mxu0 0.0
  %716 = vmatprep.subr.mxu0 0.0
  %717 = vmatpush1.msra.mxu0 0.0
  %718 = vmatprep.subr.mxu0 0.0
  %719 = vmatpush1.msra.mxu0 0.0
  %720 = vmatprep.subr.mxu0 0.0
  %721 = vmatpush1.msra.mxu0 0.0
  %722 = vmatprep.subr.mxu0 0.0
  %723 = vmatpush1.msra.mxu0 0.0
  %724 = vmatprep.subr.mxu0 0.0
  %725 = vmatpush1.msra.mxu0 0.0
  %726 = vmatprep.subr.mxu0 0.0
  %727 = vmatpush1.msra.mxu0 0.0
  %728 = vmatprep.subr.mxu0 0.0
  %729 = vmatpush1.msra.mxu0 0.0
  %730 = vmatprep.subr.mxu0 0.0
  %731 = vmatpush1.msra.mxu0 0.0
  %732 = vmatprep.subr.mxu0 0.0
  %733 = vmatpush1.msra.mxu0 0.0
  %734 = vmatprep.subr.mxu0 0.0
  %735 = vmatpush1.msra.mxu0 0.0
  %736 = vmatprep.subr.mxu0 0.0
  %737 = vmatpush1.msra.mxu0 0.0
  %738 = vmatprep.subr.mxu0 0.0
  %739 = vmatpush1.msra.mxu0 0.0
  %740 = vmatprep.subr.mxu0 0.0
  %741 = vmatpush1.msra.mxu0 0.0
  %742 = vmatprep.subr.mxu0 %v710
  %743 = vmatpush1.msra.mxu0 %v708
  %744 = vmatprep.subr.mxu0 0.0
  %745 = vmatpush2.msra.mxu0 0.0
  %746 = vmatprep.subr.mxu0 0.0
  %747 = vmatpush2.msra.mxu0 0.0
  %748 = vmatprep.subr.mxu0 0.0
  %749 = vmatpush2.msra.mxu0 0.0
  %750 = vmatprep.subr.mxu0 0.0
  %751 = vmatpush2.msra.mxu0 0.0
  %752 = vmatprep.subr.mxu0 0.0
  %753 = vmatpush2.msra.mxu0 0.0
  %754 = vmatprep.subr.mxu0 0.0
  %755 = vmatpush2.msra.mxu0 0.0
  %756 = vmatprep.subr.mxu0 0.0
  %757 = vmatpush2.msra.mxu0 0.0
  %758 = vmatprep.subr.mxu0 0.0
  %759 = vmatpush2.msra.mxu0 0.0
  %760 = vmatprep.subr.mxu0 0.0
  %761 = vmatpush2.msra.mxu0 0.0
  %762 = vmatprep.subr.mxu0 0.0
  %763 = vmatpush2.msra.mxu0 0.0
  %764 = vmatprep.subr.mxu0 0.0
  %765 = vmatpush2.msra.mxu0 0.0
  %766 = vmatprep.subr.mxu0 0.0
  %767 = vmatpush2.msra.mxu0 0.0
  %768 = vmatprep.subr.mxu0 0.0
  %769 = vmatpush2.msra.mxu0 0.0
  %770 = vmatprep.subr.mxu0 0.0
  %771 = vmatpush2.msra.mxu0 0.0
  %772 = vmatprep.subr.mxu0 0.0
  %773 = vmatpush2.msra.mxu0 0.0
  %774 = vmatprep.subr.mxu0 0.0
  %775 = vmatpush2.msra.mxu0 0.0
  %776 = vmatprep.mubr.f32.mxu0 0.0
  %777 = vmatmul.mubr.f32.gmra.mxu0 %v705
  %v778 = vpop.f32.mrf.mxu0
  %v779 = vadd.f32 0.0, %v778
  %v780 = vpop.f32.mrf.mxu0
  %v781 = vadd.f32 0.0, %v780
  %782 = vdwg.mxu0
  %v785 = vcombine.low %v779, %v781
  %v787 = vunpack.c.l.s4 1983009808
  %v788 = vunpack.c.0.s8 %v787
  %v789 = vlaneseq
  %v790 = vshrl.u32 %v789, 7
  %v791 = vsub.s32 %v788, %v790
  %v792 = vrot.slane %v785, %v791
  %vm794 = vcmask 1041408
  %vm795 = vcmask 789506
  %vm796 = vmor %vm795, %vm794
  %797 = vst.msk [vmem:[%s4] sm:$0xf] %vm796, %v792
  %798 = vst.msk [vmem:[%s3] sm:$0xf] %vm796, 1.0
  // Predicated region
  $region14: #{forward.1} parent=0 // pred_check
    _
  $region15: #{forward.1} parent=0 // pred_check_branch
    %800 = sbr.rel (0) target = $region17
  $region16: #{forward.1} parent=0 // pred_region
    _
  $region17: #{forward.1} parent=0 // pred_fallthru
    _
  // Predicated region
  $region18: #{forward.1} parent=0 // pred_check
    _
  $region19: #{forward.1} parent=0 // pred_check_branch
    %802 = sbr.rel (0) target = $region21
  $region20: #{forward.1} parent=0 // pred_region
    _
  $region21: #{forward.1} parent=0 // pred_fallthru
    _
  // Predicated region
  $region22: #{forward.1} parent=0 // pred_check
    _
  $region23: #{forward.1} parent=0 // pred_check_branch
    %804 = sbr.rel (0) target = $region25
  $region24: #{forward.1} parent=0 // pred_region
    _
  $region25: #{forward.1} parent=0 // pred_fallthru
    _
  // Predicated region
  $region26: #{forward.1} parent=0 // pred_check
    _
  $region27: #{forward.1} parent=0 // pred_check_branch
    %806 = sbr.rel (0) target = $region29
  $region28: #{forward.1} parent=0 // pred_region
    _
  $region29: #{forward.1} parent=0 // pred_fallthru
    _

</llo_original>
